<compile_context>
chip_gen: v7x
topology: tpu7x:2x2x1
jax: 0.10.0
libtpu: 0.0.40
codegen_flags: <defaults>
</compile_context>

<pallas_src>
import functools

import jax
import jax.numpy as jnp
from jax import lax
from jax.experimental import pallas as pl
from jax.experimental.pallas import tpu as pltpu


# ----------------------------------------------------------------------------
# Tuning knobs.
# ----------------------------------------------------------------------------
_BLOCK_BUDGET = 4 * 1024 * 1024    # per x block in the tiled pool (incl. lane pad)
_FUSE_MAX_ELEMS = 256 * 1024       # padded x elements allowed in the fused kernel
_FUSE_W_BUDGET = 2 * 1024 * 1024   # f32 weight bytes allowed in the fused kernel
_EPI_W_BUDGET = 2 * 1024 * 1024    # weight block bytes before K-tiling the epilogue
_POOL_UNROLL = 16                  # max statically unrolled 128-lane chunks


def _round_up(v, m):
    return ((v + m - 1) // m) * m


# ----------------------------------------------------------------------------
# Fused kernel for small problems: pool + 1x1 conv + softmax + add in one call.
# ----------------------------------------------------------------------------
def _fused_kernel(x_ref, w_ref, b_ref, o_ref, *, inv_hw, use_mxu):
    # x_ref: (N, C_in, HW); w_ref: (C_in, C_out); b_ref: (1, C_out)
    pooled = jnp.sum(x_ref[...].astype(jnp.float32), axis=-1) * inv_hw  # (N, C_in)
    w = w_ref[...].astype(jnp.float32)
    b = b_ref[...].astype(jnp.float32)
    if use_mxu:
        y = jnp.dot(pooled, w, preferred_element_type=jnp.float32) + b
    else:
        # Tiny N / C_in / C_out: MXU would be nearly empty latency — do an
        # unrolled VPU broadcast-multiply-accumulate over C_in instead.
        n, c_in = pooled.shape
        c_out = w.shape[1]
        y = jnp.broadcast_to(b, (n, c_out))
        for i in range(c_in):
            y = y + pooled[:, i:i + 1] * w[i:i + 1, :]
    # Softmax over channels (dim=1 of the NCHW output) + identity.
    m = jnp.max(y, axis=-1, keepdims=True)
    e = jnp.exp(y - m)
    d = jnp.sum(e, axis=-1, keepdims=True)
    o_ref[...] = (e / d + y).astype(o_ref.dtype)


def _fused(x3, w_mat, b_row, out_dtype):
    n, c_in, hw = x3.shape
    c_out = w_mat.shape[1]
    use_mxu = (n >= 8 and c_out >= 128) or c_in > 32
    # Everything is small -> whole arrays resident in VMEM (no grid).
    return pl.pallas_call(
        functools.partial(_fused_kernel, inv_hw=1.0 / float(hw),
                          use_mxu=use_mxu),
        out_shape=jax.ShapeDtypeStruct((n, c_out), out_dtype),
    )(x3, w_mat, b_row)


# ----------------------------------------------------------------------------
# Stage 1: global average pool over the spatial axis (mem-bound, tiled).
# ----------------------------------------------------------------------------
def _pool_fullhw_kernel(x_ref, out_ref, acc_ref, *, hw, inv_hw):
    """Full-HW blocks: each block is a contiguous slab of complete rows.

    x_ref:   (row_tile, hw)   flattened input rows
    out_ref: (row_tile, 1)    per-row mean
    acc_ref: (row_tile, 128)  f32 lane accumulator (used only for long loops)
    """
    n_full = hw // 128
    tail = hw - n_full * 128
    rows = x_ref.shape[0]
    total = jnp.zeros((rows, 1), jnp.float32)

    if 0 < n_full <= _POOL_UNROLL:
        # Short: keep the accumulator in vregs, fully unrolled VPU adds.
        acc = x_ref[:, 0:128].astype(jnp.float32)
        for c in range(1, n_full):
            acc = acc + x_ref[:, c * 128:(c + 1) * 128].astype(jnp.float32)
        total = jnp.sum(acc, axis=-1, keepdims=True)
    elif n_full > _POOL_UNROLL:
        # Long: fold through a VMEM accumulator with a hardware loop.
        acc_ref[...] = jnp.zeros_like(acc_ref)

        @pl.loop(0, n_full)
        def _(c):
            off = pl.multiple_of(c * 128, 128)
            acc_ref[...] += x_ref[:, pl.ds(off, 128)].astype(jnp.float32)

        total = jnp.sum(acc_ref[...], axis=-1, keepdims=True)

    if tail > 0:
        # hw not a multiple of 128: static tail slice, reduced once per block.
        t = x_ref[:, n_full * 128:hw].astype(jnp.float32)
        total = total + jnp.sum(t, axis=-1, keepdims=True)

    out_ref[...] = total * inv_hw


def _pool_tiled_kernel(x_ref, out_ref, acc_ref, *, hw, hw_tile, inv_hw):
    """Lane-tiled blocks (hw_tile multiple of 128, < hw).

    Remainder lanes only exist in the last HW block, so masking is gated on
    that step; interior steps are pure loads + VPU adds.
    """
    h = pl.program_id(1)
    last = pl.num_programs(1) - 1
    n_chunks = hw_tile // 128
    rem = hw % hw_tile
    rem_valid = hw_tile if rem == 0 else rem      # valid lanes in last block

    @pl.when(h == 0)
    def _init():
        acc_ref[...] = jnp.zeros_like(acc_ref)

    @pl.when(h != last)
    def _body():
        acc = acc_ref[...]
        for c in range(n_chunks):
            acc = acc + x_ref[:, c * 128:(c + 1) * 128].astype(jnp.float32)
        acc_ref[...] = acc

    @pl.when(h == last)
    def _final():
        acc = acc_ref[...]
        for c in range(n_chunks):
            lo = c * 128
            if lo + 128 <= rem_valid:                      # fully valid chunk
                acc = acc + x_ref[:, lo:lo + 128].astype(jnp.float32)
            elif lo < rem_valid:                           # straddling chunk
                lane = lax.broadcasted_iota(jnp.int32, (1, 128), 1)
                chunk = x_ref[:, lo:lo + 128]
                chunk = jnp.where(lane < (rem_valid - lo), chunk,
                                  jnp.zeros_like(chunk))
                acc = acc + chunk.astype(jnp.float32)
            # else: chunk fully past the end of the row -> skip
        out_ref[...] = jnp.sum(acc, axis=-1, keepdims=True) * inv_hw


def _pool_tiles(num_rows, hw, itemsize):
    """Pick (row_tile, hw_tile) respecting alignment, VMEM and megacore."""
    lane_pad = _round_up(hw, 128)
    if lane_pad * itemsize * 8 <= _BLOCK_BUDGET:
        hw_tile = hw                                # full HW: contiguous DMA
    else:
        hw_tile = min(2048, (hw // 128) * 128)      # multiple of 128
    lane_pad_tile = _round_up(hw_tile, 128)
    if num_rows <= 8:
        row_tile = num_rows                         # full dim is legal
    else:
        budget_rows = max(8, _BLOCK_BUDGET // max(1, lane_pad_tile * itemsize))
        row_tile = max(8, (min(budget_rows, num_rows) // 8) * 8)
        if num_rows >= 16:
            # v7x megacore: keep >= 2 blocks on the "parallel" row axis so
            # both TensorCores get work on the mem-bound stage.
            row_tile = min(row_tile, max(8, ((num_rows // 2) // 8) * 8))
    return row_tile, hw_tile


def _global_avg_pool(x2d, hw):
    """x2d: (R, HW) -> (R, 1) f32 row means, tiled & pipelined over HBM."""
    num_rows = x2d.shape[0]
    itemsize = jnp.dtype(x2d.dtype).itemsize
    row_tile, hw_tile = _pool_tiles(num_rows, hw, itemsize)
    inv_hw = 1.0 / float(hw)
    cost = pl.CostEstimate(
        flops=int(num_rows) * int(hw), transcendentals=0,
        bytes_accessed=int(num_rows) * int(hw) * itemsize + int(num_rows) * 4)

    if hw_tile == hw:
        # Full-HW blocks, 1D grid over rows.
        # TODO(synk): sweep pipeline_mode=pl.Buffered(3) on the x spec on HW.
        return pl.pallas_call(
            functools.partial(_pool_fullhw_kernel, hw=hw, inv_hw=inv_hw),
            out_shape=jax.ShapeDtypeStruct((num_rows, 1), jnp.float32),
            grid_spec=pltpu.PrefetchScalarGridSpec(
                num_scalar_prefetch=0,
                grid=(pl.cdiv(num_rows, row_tile),),
                in_specs=[pl.BlockSpec((row_tile, hw), lambda r: (r, 0))],
                out_specs=pl.BlockSpec((row_tile, 1), lambda r: (r, 0)),
                scratch_shapes=[pltpu.VMEM((row_tile, 128), jnp.float32)],
            ),
            compiler_params=pltpu.CompilerParams(
                dimension_semantics=("parallel",)),
            cost_estimate=cost,
        )(x2d)

    return pl.pallas_call(
        functools.partial(_pool_tiled_kernel, hw=hw, hw_tile=hw_tile,
                          inv_hw=inv_hw),
        out_shape=jax.ShapeDtypeStruct((num_rows, 1), jnp.float32),
        grid_spec=pltpu.PrefetchScalarGridSpec(
            num_scalar_prefetch=0,
            grid=(pl.cdiv(num_rows, row_tile), pl.cdiv(hw, hw_tile)),
            in_specs=[pl.BlockSpec((row_tile, hw_tile), lambda r, h: (r, h))],
            out_specs=pl.BlockSpec((row_tile, 1), lambda r, h: (r, 0)),
            scratch_shapes=[pltpu.VMEM((row_tile, 128), jnp.float32)],
        ),
        compiler_params=pltpu.CompilerParams(
            dimension_semantics=("parallel", "arbitrary")),
        cost_estimate=cost,
    )(x2d)


# ----------------------------------------------------------------------------
# Stage 2: 1x1 conv (channel matmul, K-tiled) + bias + softmax + add.
# ----------------------------------------------------------------------------
def _epilogue_kernel(p_ref, w_ref, b_ref, o_ref, acc_ref, *, c_in, tk,
                     use_mxu, mask_k):
    k = pl.program_id(0)

    @pl.when(k == 0)
    def _init():
        acc_ref[...] = jnp.zeros_like(acc_ref)

    pooled = p_ref[...].astype(jnp.float32)       # (N, tk)
    w = w_ref[...].astype(jnp.float32)            # (tk, C_out)
    if mask_k:
        # Last K tile may be padded with garbage; zero both factors.
        col = k * tk + lax.broadcasted_iota(jnp.int32, (1, tk), 1)
        pooled = jnp.where(col < c_in, pooled, 0.0)
        row = k * tk + lax.broadcasted_iota(jnp.int32, (tk, 1), 0)
        w = jnp.where(row < c_in, w, 0.0)

    if use_mxu:
        acc_ref[...] += jnp.dot(pooled, w, preferred_element_type=jnp.float32)
    else:
        upd = jnp.zeros_like(acc_ref)
        for i in range(tk):
            upd = upd + pooled[:, i:i + 1] * w[i:i + 1, :]
        acc_ref[...] += upd

    @pl.when(k == pl.num_programs(0) - 1)
    def _finalize():
        y = acc_ref[...] + b_ref[...].astype(jnp.float32)
        m = jnp.max(y, axis=-1, keepdims=True)
        e = jnp.exp(y - m)
        d = jnp.sum(e, axis=-1, keepdims=True)
        # Exact divide: the epilogue is latency noise, no approx needed.
        o_ref[...] = (e / d + y).astype(o_ref.dtype)


def _epilogue(pooled2d, w_mat, b_row, out_dtype):
    n, c_in = pooled2d.shape
    c_out = w_mat.shape[1]
    w_itemsize = jnp.dtype(w_mat.dtype).itemsize
    if c_in >= 256 and c_in * c_out * w_itemsize > _EPI_W_BUDGET:
        # Tile the contraction so the weight block stays ~<= 2 MiB per buffer.
        tk = max(128, (_EPI_W_BUDGET // max(1, c_out * w_itemsize)) // 128 * 128)
        tk = min(tk, (c_in // 128) * 128)
    else:
        tk = c_in
    k_steps = pl.cdiv(c_in, tk)
    mask_k = (c_in % tk) != 0
    use_mxu = (n >= 8 and c_out >= 128) or tk > 32

    return pl.pallas_call(
        functools.partial(_epilogue_kernel, c_in=c_in, tk=tk,
                          use_mxu=use_mxu, mask_k=mask_k),
        out_shape=jax.ShapeDtypeStruct((n, c_out), out_dtype),
        grid_spec=pltpu.PrefetchScalarGridSpec(
            num_scalar_prefetch=0,
            grid=(k_steps,),
            in_specs=[pl.BlockSpec((n, tk), lambda k: (0, k)),
                      pl.BlockSpec((tk, c_out), lambda k: (k, 0)),
                      pl.BlockSpec((1, c_out), lambda k: (0, 0))],
            out_specs=pl.BlockSpec((n, c_out), lambda k: (0, 0)),
            scratch_shapes=[pltpu.VMEM((n, c_out), jnp.float32)],
        ),
        compiler_params=pltpu.CompilerParams(
            dimension_semantics=("arbitrary",)),
    )(pooled2d, w_mat, b_row)


# ----------------------------------------------------------------------------
# Public wrapper matching CAModule3.forward.
# ----------------------------------------------------------------------------
def ca_module3(x, weight, bias):
    """x: (N, C_in, H, W); weight: (C_out, C_in, 1, 1); bias: (C_out,)."""
    n, c_in, h, w = x.shape
    c_out = weight.shape[0]
    hw = h * w

    w_mat = weight.reshape(c_out, c_in).T          # (C_in, C_out)
    b_row = bias.reshape(1, c_out)                 # (1, C_out)

    padded_elems = n * _round_up(c_in, 8) * _round_up(hw, 128)
    if padded_elems <= _FUSE_MAX_ELEMS and c_in * c_out * 4 <= _FUSE_W_BUDGET:
        # Small problem: single fused kernel, no pooled HBM intermediate.
        out2d = _fused(x.reshape(n, c_in, hw), w_mat, b_row, x.dtype)
    else:
        # Large problem: streaming pool (mem-bound) + tiny epilogue.
        pooled = _global_avg_pool(x.reshape(n * c_in, hw), hw)  # (N*C_in, 1) f32
        out2d = _epilogue(pooled.reshape(n, c_in), w_mat, b_row, x.dtype)

    return out2d.reshape(n, c_out, 1, 1)


def _reference(x, weight, bias):
    """Pure-JAX reference mirroring the PyTorch forward."""
    pooled = jnp.mean(x, axis=(2, 3), keepdims=True)
    y = jnp.einsum('nihw,oi->nohw', pooled, weight.reshape(weight.shape[0], -1))
    y = y + bias.reshape(1, -1, 1, 1)
    return jax.nn.softmax(y, axis=1) + y


def _run_case(n, c_in, c_out, h, w, key):
    k_x, k_w, k_b = jax.random.split(key, 3)
    x = jax.random.normal(k_x, (n, c_in, h, w), dtype=jnp.float32)
    weight = jax.random.normal(k_w, (c_out, c_in, 1, 1), dtype=jnp.float32) * 0.1
    bias = jax.random.normal(k_b, (c_out,), dtype=jnp.float32) * 0.1

    out = jax.block_until_ready(jax.jit(ca_module3)(x, weight, bias))
    ref = _reference(x, weight, bias)
    assert out.shape == (n, c_out, 1, 1), out.shape
    err = float(jnp.max(jnp.abs(out - ref)))
    assert jnp.allclose(out, ref, atol=1e-5, rtol=1e-5), (
        f"mismatch for {(n, c_in, h, w)} -> max abs err {err}")


if __name__ == "__main__":
    key = jax.random.PRNGKey(0)
    keys = jax.random.split(key, 4)

    # 1) Spec-sized small input -> fully fused single kernel (VPU conv path).
    _run_case(2, 4, 8, 16, 16, keys[0])
    # 2) Fused path with MXU 1x1 conv (C_in > 32).
    _run_case(2, 64, 128, 8, 8, keys[1])
    # 3) Two-stage path: full-HW pool blocks (pl.loop fold + non-128 tail),
    #    N*C_in = 74 (not a multiple of 8), >=2 "parallel" row blocks
    #    (megacore), MXU epilogue.
    _run_case(2, 37, 64, 115, 115, keys[2])
    # 4) Two-stage path: lane-tiled pool (hw_tile = 2048) with a masked
    #    straddling chunk in the final HW block.
    _run_case(1, 2, 8, 400, 350, keys[3])

    print("KERNEL_OK")
</pallas_src>

<mosaic_0001>
module attributes {stable_mosaic.version = 11 : i64} {
  func.func @_fused_kernel(%arg0: memref<2x4x256xf32, #tpu.memory_space<vmem>>, %arg1: memref<4x8xf32, #tpu.memory_space<vmem>>, %arg2: memref<1x8xf32, #tpu.memory_space<vmem>>, %arg3: memref<2x8xf32, #tpu.memory_space<vmem>>) attributes {dimension_semantics = [], scalar_prefetch = 0 : i64, scratch_operands = 0 : i64, tpu.core_type = #tpu.core_type<tc>} {
    %c0 = arith.constant 0 : index
    %c0_0 = arith.constant 0 : index
    %c0_1 = arith.constant 0 : index
    %0 = vector.load %arg0[%c0, %c0_0, %c0_1] : memref<2x4x256xf32, #tpu.memory_space<vmem>>, vector<2x4x256xf32>
    %cst = arith.constant dense<0.000000e+00> : vector<2x4xf32>
    %1 = vector.multi_reduction <add>, %0, %cst [2] : vector<2x4x256xf32> to vector<2x4xf32>
    %cst_2 = arith.constant 3.906250e-03 : f32
    %2 = vector.broadcast %cst_2 : f32 to vector<2x4xf32>
    %3 = arith.mulf %1, %2 : vector<2x4xf32>
    %c0_3 = arith.constant 0 : index
    %c0_4 = arith.constant 0 : index
    %4 = vector.load %arg1[%c0_3, %c0_4] : memref<4x8xf32, #tpu.memory_space<vmem>>, vector<4x8xf32>
    %c0_5 = arith.constant 0 : index
    %c0_6 = arith.constant 0 : index
    %5 = vector.load %arg2[%c0_5, %c0_6] : memref<1x8xf32, #tpu.memory_space<vmem>>, vector<1x8xf32>
    %6 = vector.shape_cast %5 : vector<1x8xf32> to vector<1x8xf32>
    %7 = vector.broadcast %6 : vector<1x8xf32> to vector<2x8xf32>
    %8 = vector.extract_strided_slice %3 {offsets = [0, 0], sizes = [2, 1], strides = [1, 1]} : vector<2x4xf32> to vector<2x1xf32>
    %9 = vector.extract_strided_slice %4 {offsets = [0, 0], sizes = [1, 8], strides = [1, 1]} : vector<4x8xf32> to vector<1x8xf32>
    %10 = vector.broadcast %8 : vector<2x1xf32> to vector<2x8xf32>
    %11 = vector.broadcast %9 : vector<1x8xf32> to vector<2x8xf32>
    %12 = arith.mulf %10, %11 : vector<2x8xf32>
    %13 = arith.addf %7, %12 : vector<2x8xf32>
    %14 = vector.extract_strided_slice %3 {offsets = [0, 1], sizes = [2, 1], strides = [1, 1]} : vector<2x4xf32> to vector<2x1xf32>
    %15 = vector.extract_strided_slice %4 {offsets = [1, 0], sizes = [1, 8], strides = [1, 1]} : vector<4x8xf32> to vector<1x8xf32>
    %16 = vector.broadcast %14 : vector<2x1xf32> to vector<2x8xf32>
    %17 = vector.broadcast %15 : vector<1x8xf32> to vector<2x8xf32>
    %18 = arith.mulf %16, %17 : vector<2x8xf32>
    %19 = arith.addf %13, %18 : vector<2x8xf32>
    %20 = vector.extract_strided_slice %3 {offsets = [0, 2], sizes = [2, 1], strides = [1, 1]} : vector<2x4xf32> to vector<2x1xf32>
    %21 = vector.extract_strided_slice %4 {offsets = [2, 0], sizes = [1, 8], strides = [1, 1]} : vector<4x8xf32> to vector<1x8xf32>
    %22 = vector.broadcast %20 : vector<2x1xf32> to vector<2x8xf32>
    %23 = vector.broadcast %21 : vector<1x8xf32> to vector<2x8xf32>
    %24 = arith.mulf %22, %23 : vector<2x8xf32>
    %25 = arith.addf %19, %24 : vector<2x8xf32>
    %26 = vector.extract_strided_slice %3 {offsets = [0, 3], sizes = [2, 1], strides = [1, 1]} : vector<2x4xf32> to vector<2x1xf32>
    %27 = vector.extract_strided_slice %4 {offsets = [3, 0], sizes = [1, 8], strides = [1, 1]} : vector<4x8xf32> to vector<1x8xf32>
    %28 = vector.broadcast %26 : vector<2x1xf32> to vector<2x8xf32>
    %29 = vector.broadcast %27 : vector<1x8xf32> to vector<2x8xf32>
    %30 = arith.mulf %28, %29 : vector<2x8xf32>
    %31 = arith.addf %25, %30 : vector<2x8xf32>
    %cst_7 = arith.constant dense<0xFF800000> : vector<2xf32>
    %32 = vector.multi_reduction <maximumf>, %31, %cst_7 [1] : vector<2x8xf32> to vector<2xf32>
    %33 = vector.shape_cast %32 : vector<2xf32> to vector<2x1xf32>
    %34 = vector.broadcast %33 : vector<2x1xf32> to vector<2x8xf32>
    %35 = arith.subf %31, %34 : vector<2x8xf32>
    %36 = math.exp %35 : vector<2x8xf32>
    %cst_8 = arith.constant dense<0.000000e+00> : vector<2xf32>
    %37 = vector.multi_reduction <add>, %36, %cst_8 [1] : vector<2x8xf32> to vector<2xf32>
    %38 = vector.shape_cast %37 : vector<2xf32> to vector<2x1xf32>
    %39 = vector.broadcast %38 : vector<2x1xf32> to vector<2x8xf32>
    %40 = arith.divf %36, %39 : vector<2x8xf32>
    %41 = arith.addf %40, %31 : vector<2x8xf32>
    %c0_9 = arith.constant 0 : index
    %c0_10 = arith.constant 0 : index
    %42 = vector.load %arg3[%c0_9, %c0_10] : memref<2x8xf32, #tpu.memory_space<vmem>>, vector<2x8xf32>
    tpu.vector_store %arg3[%c0_9, %c0_10], %41 {strides = array<i32>} : memref<2x8xf32, #tpu.memory_space<vmem>>, vector<2x8xf32>,
    return
  }
}

</mosaic_0001>

<llo_original>
// kernel: ca_module3.1
$region0: #{ca_module3.1}
  #allocation0 [shape = 'u32[]', space=smem, size = 0x4, offset = 0x4, fixed_abs, tag = 'smem constant byte address 0x4 - core index']
  #allocation1 [shape = 'u32[144,128]{1,0:T(1,128)}', space=vmem, size = 0x12000, scoped, tag = 'internal scratch']
  %s0 = inlined_call_operand.vmem [shape: f32[2,4,256], index: 0, kind: input, shape index: {}]
  %s1 = inlined_call_operand.vmem [shape: f32[4,8], index: 1, kind: input, shape index: {}]
  %s2 = inlined_call_operand.vmem [shape: f32[1,8], index: 2, kind: input, shape index: {}]
  %s3 = inlined_call_operand.hbm [shape: f32[2,8], index: 3, kind: output, shape index: {}]
  %s4 = sld [smem:[#allocation0]]
  $region22: #{ca_module3.1} parent=0
    _
  %s6 = ssub.s32 1, %s4
  %s7 = scalar_select 0, %s6, %s4
  $region1: #{ca_module3.1} parent=0
    #allocation2 [shape = 'u8[1024]{0}', space=vmem, size = 0x400, scoped, tag = 'output window, operand 0, single buffered']
    #allocation3 [shape = 's32[1]{0}', space=sflag, size = 0x4, scoped, tag = 'scoped memory for ca_module3.1']
    %8 = vsyncpa [#allocation3], 0
    // Predicated region
    $region2: #{ca_module3.1} parent=1 // pred_check
      _
    $region3: #{ca_module3.1} parent=1 // pred_check_branch
      %10 = sbr.rel (0) target = $region5
    $region4: #{ca_module3.1} parent=1 // pred_region
      _
    $region5: #{ca_module3.1} parent=1 // pred_fallthru
      _
    // Predicated region
    $region6: #{ca_module3.1} parent=1 // pred_check
      _
    $region7: #{ca_module3.1} parent=1 // pred_check_branch
      %12 = sbr.rel (0) target = $region9
    $region8: #{ca_module3.1} parent=1 // pred_region
      _
    $region9: #{ca_module3.1} parent=1 // pred_fallthru
      _
    // Predicated region
    $region10: #{ca_module3.1} parent=1 // pred_check
      _
    $region11: #{ca_module3.1} parent=1 // pred_check_branch
      %14 = sbr.rel (0) target = $region13
    $region12: #{ca_module3.1} parent=1 // pred_region
      _
    $region13: #{ca_module3.1} parent=1 // pred_fallthru
      _
    %v15 = vld [vmem:[%s0] sm:$0xff]
    %v16 = vld [vmem:[%s0 + $0x8] sm:$0xff]
    %v19 = vcombine.high %v15, %v15
    %v20 = vcombine.high %v16, %v16
    %vm23 = vcmask 1043456
    %v24 = vsel %vm23, %v15, 0.0
    %v25 = vsel %vm23, %v19, 0.0
    %v26 = vadd.f32 %v24, %v25
    %27 = vadd.xlane.f32.xlu0 %v26
    %v28 = vpop.xlane.xlu0 %27
    %v29 = vsel %vm23, %v16, 0.0
    %v30 = vsel %vm23, %v20, 0.0
    %v31 = vadd.f32 %v29, %v30
    %32 = vadd.xlane.f32.xlu0 %v31
    %v33 = vpop.xlane.xlu0 %32
    %v34 = vmul.f32 %v28, 0.00390625
    %v35 = vmul.f32 %v33, 0.00390625
    %v36 = vld [vmem:[%s1] sm:$0xf]
    %v37 = vld [vmem:[%s2] sm:$0x1]
    %v39 = vlaneseq
    %v40 = vshrl.u32 %v39, 7
    %v41 = vsub.s32 0, %v40
    %v42 = vrot.slane %v37, %v41
    %v44 = vlaneseq
    %v45 = vshrl.u32 %v44, 7
    %v46 = vsub.s32 0, %v45
    %v47 = vrot.slane %v34, %v46
    %v48 = vlaneseq
    %v49 = vshrl.u32 %v48, 7
    %v50 = vsub.s32 0, %v49
    %v51 = vrot.slane %v35, %v50
    %v52 = vlaneseq
    %v53 = vshrl.u32 %v52, 7
    %v54 = vsub.s32 0, %v53
    %v55 = vrot.slane %v36, %v54
    %58 = vbcast.lane.b32.xlu0 %v55, 256
    %v59 = vpop.permute.xlu0 %58
    %v61 = vmul.f32 %v47, %v59
    %v62 = vmul.f32 %v51, %v59
    %65 = vset.pattern.permute.xlu0 0
    %66 = vperm.xlu0 %65, %v61
    %v67 = vpop.permute.xlu0 %66
    %68 = vset.pattern.permute.xlu0 0
    %69 = vperm.xlu0 %68, %v62
    %v70 = vpop.permute.xlu0 %69
    %v71 = vlaneseq
    %v72 = vand.u32 %v71, 127
    %v73 = vlaneseq
    %v74 = vshrl.u32 %v73, 7
    %v75 = vsub.s32 %v72, %v74
    %v76 = vrot.slane %v67, %v75
    %v77 = vlaneseq
    %v78 = vshrl.u32 %v77, 7
    %v79 = vsub.s32 %v72, %v78
    %v80 = vrot.slane %v70, %v79
    %vm81 = vcmask 1041409
    %v82 = vsel %vm81, %v80, %v76
    %v84 = vadd.f32 %v42, %v82
    %v85 = vlaneseq
    %v86 = vshrl.u32 %v85, 7
    %v87 = vsub.s32 1, %v86
    %v88 = vrot.slane %v34, %v87
    %v89 = vlaneseq
    %v90 = vshrl.u32 %v89, 7
    %v91 = vsub.s32 1, %v90
    %v92 = vrot.slane %v35, %v91
    %v93 = vlaneseq
    %v94 = vshrl.u32 %v93, 7
    %v95 = vsub.s32 1, %v94
    %v96 = vrot.slane %v36, %v95
    %99 = vbcast.lane.b32.xlu0 %v96, 256
    %v100 = vpop.permute.xlu0 %99
    %v102 = vmul.f32 %v88, %v100
    %v103 = vmul.f32 %v92, %v100
    %106 = vset.pattern.permute.xlu0 0
    %107 = vperm.xlu0 %106, %v102
    %v108 = vpop.permute.xlu0 %107
    %109 = vset.pattern.permute.xlu0 0
    %110 = vperm.xlu0 %109, %v103
    %v111 = vpop.permute.xlu0 %110
    %v112 = vlaneseq
    %v113 = vshrl.u32 %v112, 7
    %v114 = vsub.s32 %v72, %v113
    %v115 = vrot.slane %v108, %v114
    %v116 = vlaneseq
    %v117 = vshrl.u32 %v116, 7
    %v118 = vsub.s32 %v72, %v117
    %v119 = vrot.slane %v111, %v118
    %v120 = vsel %vm81, %v119, %v115
    %v122 = vadd.f32 %v84, %v120
    %v123 = vlaneseq
    %v124 = vshrl.u32 %v123, 7
    %v125 = vsub.s32 2, %v124
    %v126 = vrot.slane %v34, %v125
    %v127 = vlaneseq
    %v128 = vshrl.u32 %v127, 7
    %v129 = vsub.s32 2, %v128
    %v130 = vrot.slane %v35, %v129
    %v131 = vlaneseq
    %v132 = vshrl.u32 %v131, 7
    %v133 = vsub.s32 2, %v132
    %v134 = vrot.slane %v36, %v133
    %137 = vbcast.lane.b32.xlu0 %v134, 256
    %v138 = vpop.permute.xlu0 %137
    %v140 = vmul.f32 %v126, %v138
    %v141 = vmul.f32 %v130, %v138
    %144 = vset.pattern.permute.xlu0 0
    %145 = vperm.xlu0 %144, %v140
    %v146 = vpop.permute.xlu0 %145
    %147 = vset.pattern.permute.xlu0 0
    %148 = vperm.xlu0 %147, %v141
    %v149 = vpop.permute.xlu0 %148
    %v150 = vlaneseq
    %v151 = vshrl.u32 %v150, 7
    %v152 = vsub.s32 %v72, %v151
    %v153 = vrot.slane %v146, %v152
    %v154 = vlaneseq
    %v155 = vshrl.u32 %v154, 7
    %v156 = vsub.s32 %v72, %v155
    %v157 = vrot.slane %v149, %v156
    %v158 = vsel %vm81, %v157, %v153
    %v160 = vadd.f32 %v122, %v158
    %v161 = vlaneseq
    %v162 = vshrl.u32 %v161, 7
    %v163 = vsub.s32 3, %v162
    %v164 = vrot.slane %v34, %v163
    %v165 = vlaneseq
    %v166 = vshrl.u32 %v165, 7
    %v167 = vsub.s32 3, %v166
    %v168 = vrot.slane %v35, %v167
    %v169 = vlaneseq
    %v170 = vshrl.u32 %v169, 7
    %v171 = vsub.s32 3, %v170
    %v172 = vrot.slane %v36, %v171
    %175 = vbcast.lane.b32.xlu0 %v172, 256
    %v176 = vpop.permute.xlu0 %175
    %v178 = vmul.f32 %v164, %v176
    %v179 = vmul.f32 %v168, %v176
    %182 = vset.pattern.permute.xlu0 0
    %183 = vperm.xlu0 %182, %v178
    %v184 = vpop.permute.xlu0 %183
    %185 = vset.pattern.permute.xlu0 0
    %186 = vperm.xlu0 %185, %v179
    %v187 = vpop.permute.xlu0 %186
    %v188 = vlaneseq
    %v189 = vshrl.u32 %v188, 7
    %v190 = vsub.s32 %v72, %v189
    %v191 = vrot.slane %v184, %v190
    %v192 = vlaneseq
    %v193 = vshrl.u32 %v192, 7
    %v194 = vsub.s32 %v72, %v193
    %v195 = vrot.slane %v187, %v194
    %v196 = vsel %vm81, %v195, %v191
    %v198 = vadd.f32 %v160, %v196
    %vm199 = vcmask 58368
    %v200 = vsel %vm199, %v198, -inf
    %201 = vmax.xlane.f32.xlu0 %v200
    %v202 = vpop.xlane.xlu0 %201
    %v203 = vsub.f32 %v198, %v202
    %v204 = vmul.f32 %v203, 1.442695
    %v205 = vpow.pop %v204
    %v206 = vsel %vm199, %v205, 0.0
    %207 = vadd.xlane.f32.xlu0 %v206
    %v208 = vpop.xlane.xlu0 %207
    %v209 = vrcp.pop %v208
    %v210 = vmul.f32 %v205, %v209
    %v211 = vadd.f32 %v210, %v198
    %212 = vst.msk [vmem:[#allocation2] sm:$0x3] %vm199, %v211
    // Predicated region
    $region14: #{ca_module3.1} parent=1 // pred_check
      _
    $region15: #{ca_module3.1} parent=1 // pred_check_branch
      %214 = sbr.rel (0) target = $region17
    $region16: #{ca_module3.1} parent=1 // pred_region
      %s216 = ssub.s32 32, 32
      %217 = vsyncadd [#allocation3], %s216
      %s219 = sshll.u32 [#allocation2], 4
      %s220 = int_to_ptr.vmem [resolvable:$true] %s219
      %222 = dma.vmem_to_hbm [thread:$0]  %s220, 32, %s3, [#allocation3]
    $region17: #{ca_module3.1} parent=1 // pred_fallthru
      _
    // Predicated region
    $region18: #{ca_module3.1} parent=1 // pred_check
      _
    $region19: #{ca_module3.1} parent=1 // pred_check_branch
      %224 = sbr.rel (0) target = $region21
    $region20: #{ca_module3.1} parent=1 // pred_region
      %225 = dma.done [#allocation3], 32
    $region21: #{ca_module3.1} parent=1 // pred_fallthru
      _
    %226 = vsyncpa [#allocation3], 1

</llo_original>
